<compile_context>
chip_gen: v6e
topology: v6e:2x2x1
jax: 0.10.0
libtpu: 0.0.40
codegen_flags: <defaults>
</compile_context>

<pallas_src>
import functools
import math

import jax
import jax.numpy as jnp
from jax.experimental import pallas as pl
from jax.experimental.pallas import tpu as pltpu

_LN_EPS = 1e-5  # PyTorch nn.LayerNorm default


# ----------------------------- sizing helpers --------------------------------
def _vmem_capacity_bytes():
    """Per-core VMEM capacity; conservative fallback if not on a TPU host."""
    try:
        info = pltpu.get_tpu_info()
        cap = int(getattr(info, "vmem_capacity_bytes", 0) or 0)
        if cap > 0:
            return cap
    except Exception:
        pass
    return 64 * 1024 * 1024  # v7x per-TensorCore (smallest current generation)


def _sublane_align(itemsize):
    # sub-32-bit dtypes pack along sublanes: bf16 vreg = [16,128], int8 = [32,128]
    return {4: 8, 2: 16, 1: 32}.get(int(itemsize), 8)


def _choose_row_tile(rows, row_bytes, *, n_streams, itemsize, vmem_budget):
    """Largest aligned row tile such that 2*n_streams live buffers fit budget,
    while keeping >=4 grid steps on large inputs (megacore + pipelining)."""
    align = _sublane_align(itemsize)
    if rows <= align:
        return rows  # block equals full dim -> exempt from (8,128) rule
    per_buf = max(vmem_budget // (2 * n_streams), 1)
    tr = per_buf // max(row_bytes, 1)
    tr = min(tr, max(align, rows // 4))
    tr = max(align, min(tr, rows))
    return (tr // align) * align


def _fold_factor(rows, size):
    """Rows folded per lane-row so the last dim becomes a multiple of 128."""
    if size % 128 == 0:
        return 1
    k = 128 // math.gcd(size, 128)
    return k if (k > 1 and rows % k == 0) else 1


# ----------------------------- LayerNorm kernel ------------------------------
def _layernorm_kernel(x_ref, w_ref, b_ref, o_ref, *, size, groups):
    x = x_ref[...].astype(jnp.float32)
    inv_n = 1.0 / float(size)

    if groups == 1:
        s = jnp.sum(x, axis=-1, keepdims=True)
        ss = jnp.sum(x * x, axis=-1, keepdims=True)
        mean = s * inv_n
        var = jnp.maximum(ss * inv_n - mean * mean, 0.0)
        inv = jax.lax.rsqrt(var + _LN_EPS)
        mean_f, inv_f = mean, inv
    else:
        # Lane-dense path: each lane-row holds `groups` original rows of width
        # `size`.  Per-group reduce/broadcast via 0/1 segment matrices on the
        # MXU (idle in this HBM-bound kernel); products by 0/1 are exact.
        c = size * groups
        lane = jax.lax.broadcasted_iota(jnp.int32, (c, groups), 0)
        grp = jax.lax.broadcasted_iota(jnp.int32, (c, groups), 1) * size
        seg = ((lane >= grp) & (lane < grp + size)).astype(jnp.float32)
        grp_t = jax.lax.broadcasted_iota(jnp.int32, (groups, c), 0) * size
        lane_t = jax.lax.broadcasted_iota(jnp.int32, (groups, c), 1)
        seg_t = ((lane_t >= grp_t) & (lane_t < grp_t + size)).astype(jnp.float32)

        s = jnp.dot(x, seg, preferred_element_type=jnp.float32)        # (tr, g)
        ss = jnp.dot(x * x, seg, preferred_element_type=jnp.float32)   # (tr, g)
        mean = s * inv_n
        var = jnp.maximum(ss * inv_n - mean * mean, 0.0)
        inv = jax.lax.rsqrt(var + _LN_EPS)
        mean_f = jnp.dot(mean, seg_t, preferred_element_type=jnp.float32)
        inv_f = jnp.dot(inv, seg_t, preferred_element_type=jnp.float32)

    w = w_ref[...].astype(jnp.float32)
    b = b_ref[...].astype(jnp.float32)
    o_ref[...] = ((x - mean_f) * inv_f * w + b).astype(o_ref.dtype)


def layer_norm_pallas(x2d, weight, bias):
    rows, size = x2d.shape
    itemsize = x2d.dtype.itemsize

    k = _fold_factor(rows, size)
    r2, c2 = rows // k, size * k
    xv = x2d.reshape(r2, c2)
    w2 = jnp.tile(weight.reshape(1, size), (1, k))
    b2 = jnp.tile(bias.reshape(1, size), (1, k))

    vmem_cap = _vmem_capacity_bytes()
    budget = vmem_cap // 2
    tr = _choose_row_tile(r2, c2 * itemsize, n_streams=2, itemsize=itemsize,
                          vmem_budget=budget)
    grid = (pl.cdiv(r2, tr),)
    kernel = functools.partial(_layernorm_kernel, size=size, groups=k)
    cost = pl.CostEstimate(
        flops=8 * rows * size,
        transcendentals=rows,
        bytes_accessed=2 * rows * size * itemsize + 2 * size * itemsize,
    )
    out = pl.pallas_call(
        kernel,
        out_shape=jax.ShapeDtypeStruct((r2, c2), x2d.dtype),
        grid=grid,
        in_specs=[
            pl.BlockSpec((tr, c2), lambda i: (i, 0)),
            pl.BlockSpec((1, c2), lambda i: (0, 0)),
            pl.BlockSpec((1, c2), lambda i: (0, 0)),
        ],
        out_specs=pl.BlockSpec((tr, c2), lambda i: (i, 0)),
        compiler_params=pltpu.CompilerParams(
            dimension_semantics=("parallel",),
            vmem_limit_bytes=int(vmem_cap * 3 // 4)),
        cost_estimate=cost,
    )(xv, w2, b2)
    return out.reshape(rows, size)


# --------------------- fused dropout + residual-add kernel -------------------
def _residual_dropout_kernel(seed_ref, x_ref, y_ref, o_ref, *, p, training,
                             block_rows, cols):
    y = y_ref[...].astype(jnp.float32)
    if training and p > 0.0:
        if p >= 1.0:
            y = jnp.zeros_like(y)
        else:
            # Counter-based hash PRNG (lowbias32-style): plain VPU integer ops,
            # lowers on TPU and in interpret mode (pltpu.prng_* does not).
            shape = y_ref.shape
            pid = pl.program_id(0)
            row = jax.lax.broadcasted_iota(jnp.int32, shape, 0)
            col = jax.lax.broadcasted_iota(jnp.int32, shape, 1)
            idx = ((row + pid * block_rows) * cols + col).astype(jnp.uint32)
            key = (seed_ref[0].astype(jnp.uint32) * jnp.uint32(0x9E3779B1)
                   + seed_ref[1].astype(jnp.uint32) * jnp.uint32(0x85EBCA77))
            h = idx ^ key
            h = (h ^ (h >> 16)) * jnp.uint32(0x7FEB352D)
            h = (h ^ (h >> 15)) * jnp.uint32(0x846CA68B)
            h = h ^ (h >> 16)
            # keep iff uniform-u32 >= p * 2^32 (integer-domain compare)
            thresh = jnp.uint32(min(int(p * 4294967296.0), 4294967295))
            y = jnp.where(h >= thresh, y * (1.0 / (1.0 - p)), 0.0)
    o_ref[...] = (x_ref[...].astype(jnp.float32) + y).astype(o_ref.dtype)


def residual_add_dropout_pallas(x2d, y2d, seed, salt, p, training):
    rows, size = x2d.shape
    itemsize = x2d.dtype.itemsize

    # Lane-dense view: fold k rows per lane-row if size is not a 128 multiple.
    k = _fold_factor(rows, size)
    xv = x2d.reshape(rows // k, size * k)
    yv = y2d.reshape(rows // k, size * k)
    r2, c2 = xv.shape

    vmem_cap = _vmem_capacity_bytes()
    budget = vmem_cap // 2
    tr = _choose_row_tile(r2, c2 * itemsize, n_streams=3, itemsize=itemsize,
                          vmem_budget=budget)
    grid = (pl.cdiv(r2, tr),)
    kernel = functools.partial(_residual_dropout_kernel, p=p, training=training,
                               block_rows=tr, cols=c2)
    cost = pl.CostEstimate(
        flops=3 * rows * size,
        transcendentals=0,
        bytes_accessed=3 * rows * size * itemsize,
    )
    out = pl.pallas_call(
        kernel,
        out_shape=jax.ShapeDtypeStruct((r2, c2), x2d.dtype),
        grid=grid,
        in_specs=[
            pl.BlockSpec(memory_space=pltpu.MemorySpace.SMEM),  # (seed, salt)
            pl.BlockSpec((tr, c2), lambda i: (i, 0)),            # residual x
            pl.BlockSpec((tr, c2), lambda i: (i, 0)),            # sublayer y
        ],
        out_specs=pl.BlockSpec((tr, c2), lambda i: (i, 0)),
        compiler_params=pltpu.CompilerParams(
            dimension_semantics=("parallel",),
            vmem_limit_bytes=int(vmem_cap * 3 // 4)),
        cost_estimate=cost,
        # Output reuses the sublayer-activation buffer.  Safe only because y2d
        # is dead after this call; callers must not keep a live reference.
        input_output_aliases={2: 0},
    )(jnp.asarray([seed, salt], jnp.int32), xv, yv)
    return out.reshape(rows, size)


# --------------------------- module-level wrapper ----------------------------
class SublayerConnection:
    """x + dropout(sublayer(LayerNorm(x))) — Pallas-backed."""

    def __init__(self, size, dropout, dtype=jnp.float32, layer_salt=0):
        self.size = int(size)
        self.p = float(dropout)
        self.layer_salt = int(layer_salt)  # decorrelates dropout across layers
        # nn.LayerNorm default init: weight = 1, bias = 0
        self.weight = jnp.ones((self.size,), dtype)
        self.bias = jnp.zeros((self.size,), dtype)

    def __call__(self, x, sublayer, *, training=False, seed=0):
        orig_shape = x.shape
        x2d = x.reshape(-1, self.size)
        nrm = layer_norm_pallas(x2d, self.weight, self.bias)
        # TODO(synk): the arbitrary `sublayer` callable stays in plain JAX; when
        # it is a known linear layer, LN + matmul + dropout+residual could be
        # fused into one Pallas matmul kernel to roughly halve HBM traffic.
        y = sublayer(nrm.reshape(orig_shape)).reshape(-1, self.size)
        out = residual_add_dropout_pallas(x2d, y, seed, self.layer_salt,
                                          self.p, training)
        return out.reshape(orig_shape)


if __name__ == "__main__":
    batch, seq, size = 2, 8, 32
    key = jax.random.PRNGKey(0)
    kx, kw, kb = jax.random.split(key, 3)

    x = jax.random.normal(kx, (batch, seq, size), jnp.float32)

    # Deterministic example sublayer: a plain linear layer (glue, not part of
    # the module's parameters).
    W = jax.random.normal(kw, (size, size), jnp.float32) * (1.0 / size**0.5)
    b = jax.random.normal(kb, (size,), jnp.float32) * 0.01
    sublayer = lambda z: jnp.einsum("bsd,df->bsf", z, W) + b

    p_drop = 0.1
    module = SublayerConnection(size, dropout=p_drop)

    # ---- eval mode (nn.Dropout is identity) vs pure-JAX reference ----
    out = module(x, sublayer, training=False)
    out = jax.block_until_ready(out)

    mean = jnp.mean(x, axis=-1, keepdims=True)
    var = jnp.mean((x - mean) ** 2, axis=-1, keepdims=True)
    nrm_ref = (x - mean) * jax.lax.rsqrt(var + _LN_EPS)
    y_ref = sublayer(nrm_ref)
    ref = x + y_ref
    assert out.shape == x.shape and out.dtype == x.dtype
    assert jnp.allclose(out, ref, atol=1e-4, rtol=1e-4), "mismatch vs reference"

    # ---- training mode: exercise the in-kernel dropout path ----
    out_tr = module(x, sublayer, training=True, seed=123)
    out_tr = jax.block_until_ready(out_tr)
    assert out_tr.shape == x.shape and bool(jnp.all(jnp.isfinite(out_tr)))
    # Every element must be either "dropped" (== x) or "kept" (== x + y/(1-p)).
    kept_ref = x + y_ref / (1.0 - p_drop)
    elem_ok = jnp.isclose(out_tr, x, atol=1e-5) | jnp.isclose(
        out_tr, kept_ref, atol=1e-4, rtol=1e-4)
    assert bool(jnp.all(elem_ok)), "training-mode dropout values malformed"

    print("KERNEL_OK")
</pallas_src>

<mosaic_0001>
module attributes {stable_mosaic.version = 11 : i64} {
  func.func @_layernorm_kernel(%arg0: i32, %arg1: memref<4x128xf32, #tpu.memory_space<vmem>>, %arg2: memref<1x128xf32, #tpu.memory_space<vmem>>, %arg3: memref<1x128xf32, #tpu.memory_space<vmem>>, %arg4: memref<4x128xf32, #tpu.memory_space<vmem>>) attributes {dimension_semantics = [#tpu.dimension_semantics<parallel>], iteration_bounds = array<i64: 1>, scalar_prefetch = 0 : i64, scratch_operands = 0 : i64, tpu.core_type = #tpu.core_type<tc>, window_params = [{transform_indices = @transform_0, window_bounds = array<i64: 4, 128>}, {pipeline_mode = #tpu.pipeline_mode<synchronous>, transform_indices = @transform_1, window_bounds = array<i64: 1, 128>}, {pipeline_mode = #tpu.pipeline_mode<synchronous>, transform_indices = @transform_2, window_bounds = array<i64: 1, 128>}, {transform_indices = @transform_3, window_bounds = array<i64: 4, 128>}]} {
    %c0 = arith.constant 0 : index
    %c0_0 = arith.constant 0 : index
    %0 = vector.load %arg1[%c0, %c0_0] : memref<4x128xf32, #tpu.memory_space<vmem>>, vector<4x128xf32>
    %1 = tpu.iota {dimensions = array<i32: 0>} : vector<128x4xi32>
    %2 = tpu.iota {dimensions = array<i32: 1>} : vector<128x4xi32>
    %c32_i32 = arith.constant 32 : i32
    %3 = vector.broadcast %c32_i32 : i32 to vector<128x4xi32>
    %4 = arith.muli %2, %3 : vector<128x4xi32>
    %5 = arith.cmpi sge, %1, %4 : vector<128x4xi32>
    %c32_i32_1 = arith.constant 32 : i32
    %6 = vector.broadcast %c32_i32_1 : i32 to vector<128x4xi32>
    %7 = arith.addi %4, %6 : vector<128x4xi32>
    %8 = arith.cmpi slt, %1, %7 : vector<128x4xi32>
    %9 = arith.andi %5, %8 : vector<128x4xi1>
    %10 = arith.extui %9 : vector<128x4xi1> to vector<128x4xi32>
    %11 = arith.sitofp %10 : vector<128x4xi32> to vector<128x4xf32>
    %12 = tpu.iota {dimensions = array<i32: 0>} : vector<4x128xi32>
    %c32_i32_2 = arith.constant 32 : i32
    %13 = vector.broadcast %c32_i32_2 : i32 to vector<4x128xi32>
    %14 = arith.muli %12, %13 : vector<4x128xi32>
    %15 = tpu.iota {dimensions = array<i32: 1>} : vector<4x128xi32>
    %16 = arith.cmpi sge, %15, %14 : vector<4x128xi32>
    %c32_i32_3 = arith.constant 32 : i32
    %17 = vector.broadcast %c32_i32_3 : i32 to vector<4x128xi32>
    %18 = arith.addi %14, %17 : vector<4x128xi32>
    %19 = arith.cmpi slt, %15, %18 : vector<4x128xi32>
    %20 = arith.andi %16, %19 : vector<4x128xi1>
    %21 = arith.extui %20 : vector<4x128xi1> to vector<4x128xi32>
    %22 = arith.sitofp %21 : vector<4x128xi32> to vector<4x128xf32>
    %cst = arith.constant dense<0.000000e+00> : vector<4x4xf32>
    %23 = tpu.matmul %0, %11, %cst {dimension_numbers = #tpu.dot_dimension_numbers<[1], [0], [0], [1], [0, 0, 1, 1], [], []>} : vector<4x128xf32>, vector<128x4xf32>, vector<4x4xf32> -> vector<4x4xf32>
    %24 = arith.mulf %0, %0 : vector<4x128xf32>
    %cst_4 = arith.constant dense<0.000000e+00> : vector<4x4xf32>
    %25 = tpu.matmul %24, %11, %cst_4 {dimension_numbers = #tpu.dot_dimension_numbers<[1], [0], [0], [1], [0, 0, 1, 1], [], []>} : vector<4x128xf32>, vector<128x4xf32>, vector<4x4xf32> -> vector<4x4xf32>
    %cst_5 = arith.constant 3.125000e-02 : f32
    %26 = vector.broadcast %cst_5 : f32 to vector<4x4xf32>
    %27 = arith.mulf %23, %26 : vector<4x4xf32>
    %cst_6 = arith.constant 3.125000e-02 : f32
    %28 = vector.broadcast %cst_6 : f32 to vector<4x4xf32>
    %29 = arith.mulf %25, %28 : vector<4x4xf32>
    %30 = arith.mulf %27, %27 : vector<4x4xf32>
    %31 = arith.subf %29, %30 : vector<4x4xf32>
    %cst_7 = arith.constant 0.000000e+00 : f32
    %32 = vector.broadcast %cst_7 : f32 to vector<4x4xf32>
    %33 = arith.maximumf %31, %32 : vector<4x4xf32>
    %cst_8 = arith.constant 9.99999974E-6 : f32
    %34 = vector.broadcast %cst_8 : f32 to vector<4x4xf32>
    %35 = arith.addf %33, %34 : vector<4x4xf32>
    %36 = math.rsqrt %35 : vector<4x4xf32>
    %cst_9 = arith.constant dense<0.000000e+00> : vector<4x128xf32>
    %37 = tpu.matmul %27, %22, %cst_9 {dimension_numbers = #tpu.dot_dimension_numbers<[1], [0], [0], [1], [0, 0, 1, 1], [], []>} : vector<4x4xf32>, vector<4x128xf32>, vector<4x128xf32> -> vector<4x128xf32>
    %cst_10 = arith.constant dense<0.000000e+00> : vector<4x128xf32>
    %38 = tpu.matmul %36, %22, %cst_10 {dimension_numbers = #tpu.dot_dimension_numbers<[1], [0], [0], [1], [0, 0, 1, 1], [], []>} : vector<4x4xf32>, vector<4x128xf32>, vector<4x128xf32> -> vector<4x128xf32>
    %c0_11 = arith.constant 0 : index
    %c0_12 = arith.constant 0 : index
    %39 = vector.load %arg2[%c0_11, %c0_12] : memref<1x128xf32, #tpu.memory_space<vmem>>, vector<1x128xf32>
    %c0_13 = arith.constant 0 : index
    %c0_14 = arith.constant 0 : index
    %40 = vector.load %arg3[%c0_13, %c0_14] : memref<1x128xf32, #tpu.memory_space<vmem>>, vector<1x128xf32>
    %41 = arith.subf %0, %37 : vector<4x128xf32>
    %42 = arith.mulf %41, %38 : vector<4x128xf32>
    %43 = vector.broadcast %39 : vector<1x128xf32> to vector<4x128xf32>
    %44 = arith.mulf %42, %43 : vector<4x128xf32>
    %45 = vector.broadcast %40 : vector<1x128xf32> to vector<4x128xf32>
    %46 = arith.addf %44, %45 : vector<4x128xf32>
    %c0_15 = arith.constant 0 : index
    %c0_16 = arith.constant 0 : index
    %47 = vector.load %arg4[%c0_15, %c0_16] : memref<4x128xf32, #tpu.memory_space<vmem>>, vector<4x128xf32>
    tpu.vector_store %arg4[%c0_15, %c0_16], %46 {strides = array<i32>} : memref<4x128xf32, #tpu.memory_space<vmem>>, vector<4x128xf32>,
    return
  }
  func.func @transform_0(%arg0: i32) -> (i32, i32) {
    %c0_i32 = arith.constant 0 : i32
    %c0_i32_0 = arith.constant 0 : i32
    return %arg0, %c0_i32 : i32, i32
  }
  func.func @transform_1(%arg0: i32) -> (i32, i32) {
    %c0_i32 = arith.constant 0 : i32
    %c0_i32_0 = arith.constant 0 : i32
    %c0_i32_1 = arith.constant 0 : i32
    return %c0_i32, %c0_i32_0 : i32, i32
  }
  func.func @transform_2(%arg0: i32) -> (i32, i32) {
    %c0_i32 = arith.constant 0 : i32
    %c0_i32_0 = arith.constant 0 : i32
    %c0_i32_1 = arith.constant 0 : i32
    return %c0_i32, %c0_i32_0 : i32, i32
  }
  func.func @transform_3(%arg0: i32) -> (i32, i32) {
    %c0_i32 = arith.constant 0 : i32
    %c0_i32_0 = arith.constant 0 : i32
    return %arg0, %c0_i32 : i32, i32
  }
}

</mosaic_0001>

<llo_original>
// kernel: tpu_custom_call.1
$region0: #{tpu_custom_call.1}
  #allocation0 [shape = 'u32[]', space=smem, size = 0x4, offset = 0x4, fixed_abs, tag = 'smem constant byte address 0x4 - core index']
  #allocation1 [shape = 'u32[144,128]{1,0:T(1,128)}', space=vmem, size = 0x12000, scoped, tag = 'internal scratch']
  %s0 = inlined_call_operand.hbm [shape: f32[4,128], index: 0, kind: input, shape index: {}]
  %s1 = inlined_call_operand.vmem [shape: f32[1,128], index: 1, kind: input, shape index: {}]
  %s2 = inlined_call_operand.vmem [shape: f32[1,128], index: 2, kind: input, shape index: {}]
  %s3 = inlined_call_operand.hbm [shape: f32[4,128], index: 3, kind: output, shape index: {}]
  %s4 = sld [smem:[#allocation0]]
  $region26: #{tpu_custom_call.1} parent=0
    _
  %s6 = ssub.s32 1, %s4
  %s7 = scalar_select 0, %s6, %s4
  $region1: #{tpu_custom_call.1} parent=0
    #allocation2 [shape = 'u8[2048]{0}', space=vmem, size = 0x800, scoped, tag = 'input window, operand 0, single buffered']
    #allocation3 [shape = 's32[1]{0}', space=sflag, size = 0x4, scoped, tag = 'scoped memory for tpu_custom_call.1']
    #allocation4 [shape = 's32[1]{0}', space=sflag, size = 0x4, scoped, tag = 'scoped memory for tpu_custom_call.1']
    #allocation5 [shape = 'u8[2048]{0}', space=vmem, size = 0x800, scoped, tag = 'output window, operand 0, single buffered']
    %8 = vsyncpa [#allocation3], 0
    %9 = vsyncpa [#allocation4], 0
    // Predicated region
    $region2: #{tpu_custom_call.1} parent=1 // pred_check
      _
    $region3: #{tpu_custom_call.1} parent=1 // pred_check_branch
      %11 = sbr.rel (0) target = $region5
    $region4: #{tpu_custom_call.1} parent=1 // pred_region
      %s13 = ssub.s32 64, 64
      %14 = vsyncadd [#allocation3], %s13
      %s16 = sshll.u32 [#allocation2], 4
      %s17 = int_to_ptr.vmem [resolvable:$true] %s16
      %19 = dma.hbm_to_vmem [thread:$0]  %s0, 64, %s17, [#allocation3]
    $region5: #{tpu_custom_call.1} parent=1 // pred_fallthru
      _
    // Predicated region
    $region6: #{tpu_custom_call.1} parent=1 // pred_check
      _
    $region7: #{tpu_custom_call.1} parent=1 // pred_check_branch
      %21 = sbr.rel (0) target = $region9
    $region8: #{tpu_custom_call.1} parent=1 // pred_region
      _
    $region9: #{tpu_custom_call.1} parent=1 // pred_fallthru
      _
    // Predicated region
    $region10: #{tpu_custom_call.1} parent=1 // pred_check
      _
    $region11: #{tpu_custom_call.1} parent=1 // pred_check_branch
      %23 = sbr.rel (0) target = $region13
    $region12: #{tpu_custom_call.1} parent=1 // pred_region
      _
    $region13: #{tpu_custom_call.1} parent=1 // pred_fallthru
      _
    // Predicated region
    $region14: #{tpu_custom_call.1} parent=1 // pred_check
      _
    $region15: #{tpu_custom_call.1} parent=1 // pred_check_branch
      %25 = sbr.rel (0) target = $region17
    $region16: #{tpu_custom_call.1} parent=1 // pred_region
      %26 = dma.done [#allocation3], 64
    $region17: #{tpu_custom_call.1} parent=1 // pred_fallthru
      _
    %v27 = vld [vmem:[#allocation2] sm:$0xf]
    %v28 = vlaneseq
    %v29 = vshrl.u32 %v28, 7
    %v30 = vadd.s32 %v29, 8
    %v31 = vadd.s32 %v29, 16
    %v32 = vadd.s32 %v29, 24
    %v33 = vadd.s32 %v29, 32
    %v34 = vadd.s32 %v29, 40
    %v35 = vadd.s32 %v29, 48
    %v36 = vadd.s32 %v29, 56
    %v37 = vadd.s32 %v29, 64
    %v38 = vadd.s32 %v29, 72
    %v39 = vadd.s32 %v29, 80
    %v40 = vadd.s32 %v29, 88
    %v41 = vadd.s32 %v29, 96
    %v42 = vadd.s32 %v29, 104
    %v43 = vadd.s32 %v29, 112
    %v44 = vadd.s32 %v29, 120
    %v45 = vlaneseq
    %v46 = vand.u32 %v45, 127
    %v47 = vmul.u32 %v46, 32
    %vm48 = vcmp.ge.s32.totalorder %v29, %v47
    %vm49 = vcmp.ge.s32.totalorder %v30, %v47
    %vm50 = vcmp.ge.s32.totalorder %v31, %v47
    %vm51 = vcmp.ge.s32.totalorder %v32, %v47
    %vm52 = vcmp.ge.s32.totalorder %v33, %v47
    %vm53 = vcmp.ge.s32.totalorder %v34, %v47
    %vm54 = vcmp.ge.s32.totalorder %v35, %v47
    %vm55 = vcmp.ge.s32.totalorder %v36, %v47
    %vm56 = vcmp.ge.s32.totalorder %v37, %v47
    %vm57 = vcmp.ge.s32.totalorder %v38, %v47
    %vm58 = vcmp.ge.s32.totalorder %v39, %v47
    %vm59 = vcmp.ge.s32.totalorder %v40, %v47
    %vm60 = vcmp.ge.s32.totalorder %v41, %v47
    %vm61 = vcmp.ge.s32.totalorder %v42, %v47
    %vm62 = vcmp.ge.s32.totalorder %v43, %v47
    %vm63 = vcmp.ge.s32.totalorder %v44, %v47
    %v64 = vadd.s32 %v47, 32
    %vm65 = vcmp.lt.s32.totalorder %v29, %v64
    %vm66 = vcmp.lt.s32.totalorder %v30, %v64
    %vm67 = vcmp.lt.s32.totalorder %v31, %v64
    %vm68 = vcmp.lt.s32.totalorder %v32, %v64
    %vm69 = vcmp.lt.s32.totalorder %v33, %v64
    %vm70 = vcmp.lt.s32.totalorder %v34, %v64
    %vm71 = vcmp.lt.s32.totalorder %v35, %v64
    %vm72 = vcmp.lt.s32.totalorder %v36, %v64
    %vm73 = vcmp.lt.s32.totalorder %v37, %v64
    %vm74 = vcmp.lt.s32.totalorder %v38, %v64
    %vm75 = vcmp.lt.s32.totalorder %v39, %v64
    %vm76 = vcmp.lt.s32.totalorder %v40, %v64
    %vm77 = vcmp.lt.s32.totalorder %v41, %v64
    %vm78 = vcmp.lt.s32.totalorder %v42, %v64
    %vm79 = vcmp.lt.s32.totalorder %v43, %v64
    %vm80 = vcmp.lt.s32.totalorder %v44, %v64
    %vm81 = vmand %vm48, %vm65
    %vm82 = vmand %vm49, %vm66
    %vm83 = vmand %vm50, %vm67
    %vm84 = vmand %vm51, %vm68
    %vm85 = vmand %vm52, %vm69
    %vm86 = vmand %vm53, %vm70
    %vm87 = vmand %vm54, %vm71
    %vm88 = vmand %vm55, %vm72
    %vm89 = vmand %vm56, %vm73
    %vm90 = vmand %vm57, %vm74
    %vm91 = vmand %vm58, %vm75
    %vm92 = vmand %vm59, %vm76
    %vm93 = vmand %vm60, %vm77
    %vm94 = vmand %vm61, %vm78
    %vm95 = vmand %vm62, %vm79
    %vm96 = vmand %vm63, %vm80
    %v97 = vsel %vm81, 1, 0
    %v98 = vsel %vm82, 1, 0
    %v99 = vsel %vm83, 1, 0
    %v100 = vsel %vm84, 1, 0
    %v101 = vsel %vm85, 1, 0
    %v102 = vsel %vm86, 1, 0
    %v103 = vsel %vm87, 1, 0
    %v104 = vsel %vm88, 1, 0
    %v105 = vsel %vm89, 1, 0
    %v106 = vsel %vm90, 1, 0
    %v107 = vsel %vm91, 1, 0
    %v108 = vsel %vm92, 1, 0
    %v109 = vsel %vm93, 1, 0
    %v110 = vsel %vm94, 1, 0
    %v111 = vsel %vm95, 1, 0
    %v112 = vsel %vm96, 1, 0
    %v113 = vcvt.s32.f32 %v97
    %v114 = vcvt.s32.f32 %v98
    %v115 = vcvt.s32.f32 %v99
    %v116 = vcvt.s32.f32 %v100
    %v117 = vcvt.s32.f32 %v101
    %v118 = vcvt.s32.f32 %v102
    %v119 = vcvt.s32.f32 %v103
    %v120 = vcvt.s32.f32 %v104
    %v121 = vcvt.s32.f32 %v105
    %v122 = vcvt.s32.f32 %v106
    %v123 = vcvt.s32.f32 %v107
    %v124 = vcvt.s32.f32 %v108
    %v125 = vcvt.s32.f32 %v109
    %v126 = vcvt.s32.f32 %v110
    %v127 = vcvt.s32.f32 %v111
    %v128 = vcvt.s32.f32 %v112
    %v129 = vmul.u32 %v29, 32
    %vm130 = vcmp.ge.s32.totalorder %v46, %v129
    %v131 = vadd.s32 %v129, 32
    %vm132 = vcmp.lt.s32.totalorder %v46, %v131
    %vm133 = vmand %vm130, %vm132
    %v134 = vsel %vm133, 1, 0
    %v135 = vcvt.s32.f32 %v134
    %136 = vmatprep.subr.mxu0 0.0
    %137 = vmatpush1.msra.mxu0 %v128
    %138 = vmatprep.subr.mxu0 0.0
    %139 = vmatpush1.msra.mxu0 %v127
    %140 = vmatprep.subr.mxu0 0.0
    %141 = vmatpush1.msra.mxu0 %v126
    %142 = vmatprep.subr.mxu0 0.0
    %143 = vmatpush1.msra.mxu0 %v125
    %144 = vmatprep.subr.mxu0 0.0
    %145 = vmatpush1.msra.mxu0 %v124
    %146 = vmatprep.subr.mxu0 0.0
    %147 = vmatpush1.msra.mxu0 %v123
    %148 = vmatprep.subr.mxu0 0.0
    %149 = vmatpush1.msra.mxu0 %v122
    %150 = vmatprep.subr.mxu0 0.0
    %151 = vmatpush1.msra.mxu0 %v121
    %152 = vmatprep.subr.mxu0 0.0
    %153 = vmatpush1.msra.mxu0 %v120
    %154 = vmatprep.subr.mxu0 0.0
    %155 = vmatpush1.msra.mxu0 %v119
    %156 = vmatprep.subr.mxu0 0.0
    %157 = vmatpush1.msra.mxu0 %v118
    %158 = vmatprep.subr.mxu0 0.0
    %159 = vmatpush1.msra.mxu0 %v117
    %160 = vmatprep.subr.mxu0 0.0
    %161 = vmatpush1.msra.mxu0 %v116
    %162 = vmatprep.subr.mxu0 0.0
    %163 = vmatpush1.msra.mxu0 %v115
    %164 = vmatprep.subr.mxu0 0.0
    %165 = vmatpush1.msra.mxu0 %v114
    %166 = vmatprep.subr.mxu0 0.0
    %167 = vmatpush1.msra.mxu0 %v113
    %168 = vmatprep.subr.mxu0 0.0
    %169 = vmatpush2.msra.mxu0 0.0
    %170 = vmatprep.subr.mxu0 0.0
    %171 = vmatpush2.msra.mxu0 0.0
    %172 = vmatprep.subr.mxu0 0.0
    %173 = vmatpush2.msra.mxu0 0.0
    %174 = vmatprep.subr.mxu0 0.0
    %175 = vmatpush2.msra.mxu0 0.0
    %176 = vmatprep.subr.mxu0 0.0
    %177 = vmatpush2.msra.mxu0 0.0
    %178 = vmatprep.subr.mxu0 0.0
    %179 = vmatpush2.msra.mxu0 0.0
    %180 = vmatprep.subr.mxu0 0.0
    %181 = vmatpush2.msra.mxu0 0.0
    %182 = vmatprep.subr.mxu0 0.0
    %183 = vmatpush2.msra.mxu0 0.0
    %184 = vmatprep.subr.mxu0 0.0
    %185 = vmatpush2.msra.mxu0 0.0
    %186 = vmatprep.subr.mxu0 0.0
    %187 = vmatpush2.msra.mxu0 0.0
    %188 = vmatprep.subr.mxu0 0.0
    %189 = vmatpush2.msra.mxu0 0.0
    %190 = vmatprep.subr.mxu0 0.0
    %191 = vmatpush2.msra.mxu0 0.0
    %192 = vmatprep.subr.mxu0 0.0
    %193 = vmatpush2.msra.mxu0 0.0
    %194 = vmatprep.subr.mxu0 0.0
    %195 = vmatpush2.msra.mxu0 0.0
    %196 = vmatprep.subr.mxu0 0.0
    %197 = vmatpush2.msra.mxu0 0.0
    %198 = vmatprep.subr.mxu0 0.0
    %199 = vmatpush2.msra.mxu0 0.0
    %200 = vmatprep.mubr.f32.mxu0 0.0
    %201 = vmatmul.mubr.f32.gmra.mxu0 %v27
    %v202 = vpop.f32.mrf.mxu0
    %v203 = vadd.f32 0.0, %v202
    %v204 = vpop.f32.mrf.mxu0
    %205 = vdwg.mxu0
    %v206 = vmul.f32 %v27, %v27
    %207 = vmatprep.subr.mxu0 0.0
    %208 = vmatpush1.msra.mxu0 %v128
    %209 = vmatprep.subr.mxu0 0.0
    %210 = vmatpush1.msra.mxu0 %v127
    %211 = vmatprep.subr.mxu0 0.0
    %212 = vmatpush1.msra.mxu0 %v126
    %213 = vmatprep.subr.mxu0 0.0
    %214 = vmatpush1.msra.mxu0 %v125
    %215 = vmatprep.subr.mxu0 0.0
    %216 = vmatpush1.msra.mxu0 %v124
    %217 = vmatprep.subr.mxu0 0.0
    %218 = vmatpush1.msra.mxu0 %v123
    %219 = vmatprep.subr.mxu0 0.0
    %220 = vmatpush1.msra.mxu0 %v122
    %221 = vmatprep.subr.mxu0 0.0
    %222 = vmatpush1.msra.mxu0 %v121
    %223 = vmatprep.subr.mxu0 0.0
    %224 = vmatpush1.msra.mxu0 %v120
    %225 = vmatprep.subr.mxu0 0.0
    %226 = vmatpush1.msra.mxu0 %v119
    %227 = vmatprep.subr.mxu0 0.0
    %228 = vmatpush1.msra.mxu0 %v118
    %229 = vmatprep.subr.mxu0 0.0
    %230 = vmatpush1.msra.mxu0 %v117
    %231 = vmatprep.subr.mxu0 0.0
    %232 = vmatpush1.msra.mxu0 %v116
    %233 = vmatprep.subr.mxu0 0.0
    %234 = vmatpush1.msra.mxu0 %v115
    %235 = vmatprep.subr.mxu0 0.0
    %236 = vmatpush1.msra.mxu0 %v114
    %237 = vmatprep.subr.mxu0 0.0
    %238 = vmatpush1.msra.mxu0 %v113
    %239 = vmatprep.subr.mxu0 0.0
    %240 = vmatpush2.msra.mxu0 0.0
    %241 = vmatprep.subr.mxu0 0.0
    %242 = vmatpush2.msra.mxu0 0.0
    %243 = vmatprep.subr.mxu0 0.0
    %244 = vmatpush2.msra.mxu0 0.0
    %245 = vmatprep.subr.mxu0 0.0
    %246 = vmatpush2.msra.mxu0 0.0
    %247 = vmatprep.subr.mxu0 0.0
    %248 = vmatpush2.msra.mxu0 0.0
    %249 = vmatprep.subr.mxu0 0.0
    %250 = vmatpush2.msra.mxu0 0.0
    %251 = vmatprep.subr.mxu0 0.0
    %252 = vmatpush2.msra.mxu0 0.0
    %253 = vmatprep.subr.mxu0 0.0
    %254 = vmatpush2.msra.mxu0 0.0
    %255 = vmatprep.subr.mxu0 0.0
    %256 = vmatpush2.msra.mxu0 0.0
    %257 = vmatprep.subr.mxu0 0.0
    %258 = vmatpush2.msra.mxu0 0.0
    %259 = vmatprep.subr.mxu0 0.0
    %260 = vmatpush2.msra.mxu0 0.0
    %261 = vmatprep.subr.mxu0 0.0
    %262 = vmatpush2.msra.mxu0 0.0
    %263 = vmatprep.subr.mxu0 0.0
    %264 = vmatpush2.msra.mxu0 0.0
    %265 = vmatprep.subr.mxu0 0.0
    %266 = vmatpush2.msra.mxu0 0.0
    %267 = vmatprep.subr.mxu0 0.0
    %268 = vmatpush2.msra.mxu0 0.0
    %269 = vmatprep.subr.mxu0 0.0
    %270 = vmatpush2.msra.mxu0 0.0
    %271 = vmatprep.mubr.f32.mxu0 0.0
    %272 = vmatmul.mubr.f32.gmra.mxu0 %v206
    %v273 = vpop.f32.mrf.mxu0
    %v274 = vadd.f32 0.0, %v273
    %v275 = vpop.f32.mrf.mxu0
    %276 = vdwg.mxu0
    %v277 = vmul.f32 %v203, 0.03125
    %v278 = vmul.f32 %v274, 0.03125
    %v279 = vmul.f32 %v277, %v277
    %v280 = vsub.f32 %v278, %v279
    %v281 = vmax.f32 %v280, 0.0
    %v282 = vadd.f32 %v281, 1e-05
    %v283 = vrsqrt.pop %v282
    %vm284 = vcmask 31744
    %v286 = vsel %vm284, %v277, 0
    %vm288 = vcmask 1043456
    %v290 = vsel %vm288, %v135, 0
    %292 = vmatprep.subr.mxu0 0.0
    %293 = vmatpush1.msra.mxu0 0.0
    %294 = vmatprep.subr.mxu0 0.0
    %295 = vmatpush1.msra.mxu0 0.0
    %296 = vmatprep.subr.mxu0 0.0
    %297 = vmatpush1.msra.mxu0 0.0
    %298 = vmatprep.subr.mxu0 0.0
    %299 = vmatpush1.msra.mxu0 0.0
    %300 = vmatprep.subr.mxu0 0.0
    %301 = vmatpush1.msra.mxu0 0.0
    %302 = vmatprep.subr.mxu0 0.0
    %303 = vmatpush1.msra.mxu0 0.0
    %304 = vmatprep.subr.mxu0 0.0
    %305 = vmatpush1.msra.mxu0 0.0
    %306 = vmatprep.subr.mxu0 0.0
    %307 = vmatpush1.msra.mxu0 0.0
    %308 = vmatprep.subr.mxu0 0.0
    %309 = vmatpush1.msra.mxu0 0.0
    %310 = vmatprep.subr.mxu0 0.0
    %311 = vmatpush1.msra.mxu0 0.0
    %312 = vmatprep.subr.mxu0 0.0
    %313 = vmatpush1.msra.mxu0 0.0
    %314 = vmatprep.subr.mxu0 0.0
    %315 = vmatpush1.msra.mxu0 0.0
    %316 = vmatprep.subr.mxu0 0.0
    %317 = vmatpush1.msra.mxu0 0.0
    %318 = vmatprep.subr.mxu0 0.0
    %319 = vmatpush1.msra.mxu0 0.0
    %320 = vmatprep.subr.mxu0 0.0
    %321 = vmatpush1.msra.mxu0 0.0
    %322 = vmatprep.subr.mxu0 0.0
    %323 = vmatpush1.msra.mxu0 %v290
    %324 = vmatprep.subr.mxu0 0.0
    %325 = vmatpush2.msra.mxu0 0.0
    %326 = vmatprep.subr.mxu0 0.0
    %327 = vmatpush2.msra.mxu0 0.0
    %328 = vmatprep.subr.mxu0 0.0
    %329 = vmatpush2.msra.mxu0 0.0
    %330 = vmatprep.subr.mxu0 0.0
    %331 = vmatpush2.msra.mxu0 0.0
    %332 = vmatprep.subr.mxu0 0.0
    %333 = vmatpush2.msra.mxu0 0.0
    %334 = vmatprep.subr.mxu0 0.0
    %335 = vmatpush2.msra.mxu0 0.0
    %336 = vmatprep.subr.mxu0 0.0
    %337 = vmatpush2.msra.mxu0 0.0
    %338 = vmatprep.subr.mxu0 0.0
    %339 = vmatpush2.msra.mxu0 0.0
    %340 = vmatprep.subr.mxu0 0.0
    %341 = vmatpush2.msra.mxu0 0.0
    %342 = vmatprep.subr.mxu0 0.0
    %343 = vmatpush2.msra.mxu0 0.0
    %344 = vmatprep.subr.mxu0 0.0
    %345 = vmatpush2.msra.mxu0 0.0
    %346 = vmatprep.subr.mxu0 0.0
    %347 = vmatpush2.msra.mxu0 0.0
    %348 = vmatprep.subr.mxu0 0.0
    %349 = vmatpush2.msra.mxu0 0.0
    %350 = vmatprep.subr.mxu0 0.0
    %351 = vmatpush2.msra.mxu0 0.0
    %352 = vmatprep.subr.mxu0 0.0
    %353 = vmatpush2.msra.mxu0 0.0
    %354 = vmatprep.subr.mxu0 0.0
    %355 = vmatpush2.msra.mxu0 0.0
    %356 = vmatprep.mubr.f32.mxu0 0.0
    %357 = vmatmul.mubr.f32.gmra.mxu0 %v286
    %v358 = vpop.f32.mrf.mxu0
    %v359 = vadd.f32 0.0, %v358
    %v360 = vpop.f32.mrf.mxu0
    %361 = vdwg.mxu0
    %v363 = vsel %vm284, %v283, 0
    %365 = vmatprep.subr.mxu0 0.0
    %366 = vmatpush1.msra.mxu0 0.0
    %367 = vmatprep.subr.mxu0 0.0
    %368 = vmatpush1.msra.mxu0 0.0
    %369 = vmatprep.subr.mxu0 0.0
    %370 = vmatpush1.msra.mxu0 0.0
    %371 = vmatprep.subr.mxu0 0.0
    %372 = vmatpush1.msra.mxu0 0.0
    %373 = vmatprep.subr.mxu0 0.0
    %374 = vmatpush1.msra.mxu0 0.0
    %375 = vmatprep.subr.mxu0 0.0
    %376 = vmatpush1.msra.mxu0 0.0
    %377 = vmatprep.subr.mxu0 0.0
    %378 = vmatpush1.msra.mxu0 0.0
    %379 = vmatprep.subr.mxu0 0.0
    %380 = vmatpush1.msra.mxu0 0.0
    %381 = vmatprep.subr.mxu0 0.0
    %382 = vmatpush1.msra.mxu0 0.0
    %383 = vmatprep.subr.mxu0 0.0
    %384 = vmatpush1.msra.mxu0 0.0
    %385 = vmatprep.subr.mxu0 0.0
    %386 = vmatpush1.msra.mxu0 0.0
    %387 = vmatprep.subr.mxu0 0.0
    %388 = vmatpush1.msra.mxu0 0.0
    %389 = vmatprep.subr.mxu0 0.0
    %390 = vmatpush1.msra.mxu0 0.0
    %391 = vmatprep.subr.mxu0 0.0
    %392 = vmatpush1.msra.mxu0 0.0
    %393 = vmatprep.subr.mxu0 0.0
    %394 = vmatpush1.msra.mxu0 0.0
    %395 = vmatprep.subr.mxu0 0.0
    %396 = vmatpush1.msra.mxu0 %v290
    %397 = vmatprep.subr.mxu0 0.0
    %398 = vmatpush2.msra.mxu0 0.0
    %399 = vmatprep.subr.mxu0 0.0
    %400 = vmatpush2.msra.mxu0 0.0
    %401 = vmatprep.subr.mxu0 0.0
    %402 = vmatpush2.msra.mxu0 0.0
    %403 = vmatprep.subr.mxu0 0.0
    %404 = vmatpush2.msra.mxu0 0.0
    %405 = vmatprep.subr.mxu0 0.0
    %406 = vmatpush2.msra.mxu0 0.0
    %407 = vmatprep.subr.mxu0 0.0
    %408 = vmatpush2.msra.mxu0 0.0
    %409 = vmatprep.subr.mxu0 0.0
    %410 = vmatpush2.msra.mxu0 0.0
    %411 = vmatprep.subr.mxu0 0.0
    %412 = vmatpush2.msra.mxu0 0.0
    %413 = vmatprep.subr.mxu0 0.0
    %414 = vmatpush2.msra.mxu0 0.0
    %415 = vmatprep.subr.mxu0 0.0
    %416 = vmatpush2.msra.mxu0 0.0
    %417 = vmatprep.subr.mxu0 0.0
    %418 = vmatpush2.msra.mxu0 0.0
    %419 = vmatprep.subr.mxu0 0.0
    %420 = vmatpush2.msra.mxu0 0.0
    %421 = vmatprep.subr.mxu0 0.0
    %422 = vmatpush2.msra.mxu0 0.0
    %423 = vmatprep.subr.mxu0 0.0
    %424 = vmatpush2.msra.mxu0 0.0
    %425 = vmatprep.subr.mxu0 0.0
    %426 = vmatpush2.msra.mxu0 0.0
    %427 = vmatprep.subr.mxu0 0.0
    %428 = vmatpush2.msra.mxu0 0.0
    %429 = vmatprep.mubr.f32.mxu0 0.0
    %430 = vmatmul.mubr.f32.gmra.mxu0 %v363
    %v431 = vpop.f32.mrf.mxu0
    %v432 = vadd.f32 0.0, %v431
    %v433 = vpop.f32.mrf.mxu0
    %434 = vdwg.mxu0
    %v435 = vld [vmem:[%s1] sm:$0x1]
    %v436 = vld [vmem:[%s2] sm:$0x1]
    %v437 = vsub.f32 %v27, %v359
    %v438 = vmul.f32 %v437, %v432
    %v440 = vlaneseq
    %v441 = vshrl.u32 %v440, 7
    %v442 = vsub.s32 0, %v441
    %v443 = vrot.slane %v435, %v442
    %v445 = vmul.f32 %v438, %v443
    %v447 = vlaneseq
    %v448 = vshrl.u32 %v447, 7
    %v449 = vsub.s32 0, %v448
    %v450 = vrot.slane %v436, %v449
    %v452 = vadd.f32 %v445, %v450
    %453 = vst [vmem:[#allocation5] sm:$0xf] %v452
    // Predicated region
    $region18: #{tpu_custom_call.1} parent=1 // pred_check
      _
    $region19: #{tpu_custom_call.1} parent=1 // pred_check_branch
      %455 = sbr.rel (0) target = $region21
    $region20: #{tpu_custom_call.1} parent=1 // pred_region
      %s457 = ssub.s32 64, 64
      %458 = vsyncadd [#allocation4], %s457
      %s460 = sshll.u32 [#allocation5], 4
      %s461 = int_to_ptr.vmem [resolvable:$true] %s460
      %463 = dma.vmem_to_hbm [thread:$0]  %s461, 64, %s3, [#allocation4]
    $region21: #{tpu_custom_call.1} parent=1 // pred_fallthru
      _
    // Predicated region
    $region22: #{tpu_custom_call.1} parent=1 // pred_check
      _
    $region23: #{tpu_custom_call.1} parent=1 // pred_check_branch
      %465 = sbr.rel (0) target = $region25
    $region24: #{tpu_custom_call.1} parent=1 // pred_region
      %466 = dma.done [#allocation4], 64
    $region25: #{tpu_custom_call.1} parent=1 // pred_fallthru
      _
    %467 = vsyncpa [#allocation3], 1
    %468 = vsyncpa [#allocation4], 1

</llo_original>
